<compile_context>
chip_gen: v6e
topology: v6e:2x2x1
jax: 0.10.0
libtpu: 0.0.40
codegen_flags: <defaults>
</compile_context>

<pallas_src>
import math

import jax
import jax.numpy as jnp
from jax.experimental import pallas as pl
from jax.experimental.pallas import tpu as pltpu


def _copy_kernel(x_ref, o_ref):
    # `view` has no arithmetic; the only "compute" is this full-block copy.
    o_ref[...] = x_ref[...]


_LANE = 128
_TARGET_BLOCK_BYTES = 2 * 1024 * 1024  # ~2 MiB/block -> ~8 MiB double-buffered


def view_flatten(x: jax.Array) -> jax.Array:
    """Pallas equivalent of PyTorch ``x.view(b, -1)`` for a 4-D (B, C, H, W) input."""
    assert x.ndim == 4, "View expects a 4-D (B, C, H, W) input"
    b = x.shape[0]
    f = math.prod(x.shape[1:])
    total = b * f
    itemsize = jnp.dtype(x.dtype).itemsize

    # ---- lane/sublane-dense slab layout for the streaming copy ----------------
    # Sublane packing granule: f32 -> 8 rows, bf16 -> 16, int8/fp8 -> 32.
    sub = max(8, 32 // itemsize)

    # Lane width: wide (long contiguous DMA rows), shrunk for tiny inputs so the
    # slab still has at least `sub` rows.
    lane = 1024
    while lane > _LANE and total < sub * lane:
        lane //= 2

    # Rows per block sized for ~_TARGET_BLOCK_BYTES, a multiple of `sub` so every
    # vld/vst is a full, unmasked vreg.
    rows_per_block = max(sub, (_TARGET_BLOCK_BYTES // (lane * itemsize)) // sub * sub)

    # Rows needed to hold the data, rounded up to the sublane granule.
    rows_needed = pl.cdiv(total, lane)
    rows_needed = pl.cdiv(rows_needed, sub) * sub

    if rows_needed <= rows_per_block:
        if rows_needed >= 2 * sub:
            # Split into (at least) 2 grid steps so v7x can shard across both TCs.
            rows_per_block = pl.cdiv(rows_needed // sub, 2) * sub
        else:
            rows_per_block = rows_needed
    grid_m = pl.cdiv(rows_needed, rows_per_block)
    slab_rows = grid_m * rows_per_block          # divisible grid, no ragged blocks
    total_pad = slab_rows * lane

    # ---- metadata reshape (zero-pad only when the slab granule requires it) ---
    x_flat = jnp.reshape(x, (total,))            # row-major collapse == torch .view(b, -1)
    if total_pad != total:
        x_flat = jnp.pad(x_flat, (0, total_pad - total))
    x_slab = jnp.reshape(x_flat, (slab_rows, lane))

    block_bytes = rows_per_block * lane * itemsize
    # Enough for 2-in + 2-out double buffers plus headroom; capped well below
    # v7x's 64 MiB physical VMEM.
    vmem_limit = int(min(48 * 1024 * 1024, max(8 * 1024 * 1024, 6 * block_bytes)))

    out_slab = pl.pallas_call(
        _copy_kernel,
        out_shape=jax.ShapeDtypeStruct((slab_rows, lane), x.dtype),
        grid_spec=pltpu.PrefetchScalarGridSpec(
            num_scalar_prefetch=0,
            grid=(grid_m,),
            in_specs=[pl.BlockSpec((rows_per_block, lane), lambda i: (i, 0))],
            out_specs=pl.BlockSpec((rows_per_block, lane), lambda i: (i, 0)),
        ),
        compiler_params=pltpu.CompilerParams(
            dimension_semantics=("parallel",),
            vmem_limit_bytes=vmem_limit,
        ),
        cost_estimate=pl.CostEstimate(
            flops=0,
            transcendentals=0,
            bytes_accessed=2 * total_pad * itemsize,
        ),
        input_output_aliases={0: 0},
    )(x_slab)

    # Metadata-only un-slab back to the logical (b, f) output (slice only when padded).
    out_flat = jnp.reshape(out_slab, (total_pad,))
    if total_pad != total:
        out_flat = out_flat[:total]
    return jnp.reshape(out_flat, (b, f))


if __name__ == "__main__":
    key = jax.random.PRNGKey(0)
    # Small shapes consistent with the module's 4-D input assumption.
    B, C, H, W = 2, 4, 16, 16
    x = jax.random.normal(key, (B, C, H, W), dtype=jnp.float32)

    y = view_flatten(x)
    y = jax.block_until_ready(y)

    # Reference: plain JAX flatten (same semantics as torch .view(b, -1)).
    y_ref = jnp.reshape(x, (B, -1))

    assert y.shape == (B, C * H * W), y.shape
    assert y.dtype == x.dtype
    assert jnp.array_equal(y, y_ref), "Pallas flatten mismatch vs reference"

    print("KERNEL_OK")
</pallas_src>

<mosaic_0001>
module attributes {stable_mosaic.version = 11 : i64} {
  func.func @_copy_kernel(%arg0: i32, %arg1: memref<8x256xf32, #tpu.memory_space<vmem>>, %arg2: memref<8x256xf32, #tpu.memory_space<vmem>>) attributes {dimension_semantics = [#tpu.dimension_semantics<parallel>], iteration_bounds = array<i64: 1>, scalar_prefetch = 0 : i64, scratch_operands = 0 : i64, tpu.core_type = #tpu.core_type<tc>, window_params = [{transform_indices = @transform_0, window_bounds = array<i64: 8, 256>}, {transform_indices = @transform_1, window_bounds = array<i64: 8, 256>}]} {
    %c0 = arith.constant 0 : index
    %c0_0 = arith.constant 0 : index
    %0 = vector.load %arg1[%c0, %c0_0] : memref<8x256xf32, #tpu.memory_space<vmem>>, vector<8x256xf32>
    %c0_1 = arith.constant 0 : index
    %c0_2 = arith.constant 0 : index
    %1 = vector.load %arg2[%c0_1, %c0_2] : memref<8x256xf32, #tpu.memory_space<vmem>>, vector<8x256xf32>
    tpu.vector_store %arg2[%c0_1, %c0_2], %0 {strides = array<i32>} : memref<8x256xf32, #tpu.memory_space<vmem>>, vector<8x256xf32>,
    return
  }
  func.func @transform_0(%arg0: i32) -> (i32, i32) {
    %c0_i32 = arith.constant 0 : i32
    %c0_i32_0 = arith.constant 0 : i32
    return %arg0, %c0_i32 : i32, i32
  }
  func.func @transform_1(%arg0: i32) -> (i32, i32) {
    %c0_i32 = arith.constant 0 : i32
    %c0_i32_0 = arith.constant 0 : i32
    return %arg0, %c0_i32 : i32, i32
  }
}

</mosaic_0001>

<llo_original>
// kernel: tpu_custom_call.1
$region0: #{tpu_custom_call.1}
  #allocation0 [shape = 'u32[]', space=smem, size = 0x4, offset = 0x4, fixed_abs, tag = 'smem constant byte address 0x4 - core index']
  #allocation1 [shape = 'u32[144,128]{1,0:T(1,128)}', space=vmem, size = 0x12000, scoped, tag = 'internal scratch']
  %s0 = inlined_call_operand.hbm [shape: f32[8,256], index: 0, kind: input, shape index: {}, may-alias: {0,1}]
  %s1 = inlined_call_operand.hbm [shape: f32[8,256], index: 1, kind: output, shape index: {}, may-alias: {0,1}]
  %s2 = sld [smem:[#allocation0]]
  $region18: #{tpu_custom_call.1} parent=0
    _
  %s4 = ssub.s32 1, %s2
  %s5 = scalar_select 0, %s4, %s2
  $region1: #{tpu_custom_call.1} parent=0
    #allocation2 [shape = 'u8[8192]{0}', space=vmem, size = 0x2000, scoped, tag = 'input window, operand 0, single buffered']
    #allocation3 [shape = 's32[1]{0}', space=sflag, size = 0x4, scoped, tag = 'scoped memory for tpu_custom_call.1']
    #allocation4 [shape = 's32[1]{0}', space=sflag, size = 0x4, scoped, tag = 'scoped memory for tpu_custom_call.1']
    #allocation5 [shape = 'u8[8192]{0}', space=vmem, size = 0x2000, scoped, tag = 'output window, operand 0, single buffered']
    %6 = vsyncpa [#allocation3], 0
    %7 = vsyncpa [#allocation4], 0
    // Predicated region
    $region2: #{tpu_custom_call.1} parent=1 // pred_check
      _
    $region3: #{tpu_custom_call.1} parent=1 // pred_check_branch
      %9 = sbr.rel (0) target = $region5
    $region4: #{tpu_custom_call.1} parent=1 // pred_region
      %s11 = ssub.s32 256, 256
      %12 = vsyncadd [#allocation3], %s11
      %s14 = sshll.u32 [#allocation2], 4
      %s15 = int_to_ptr.vmem [resolvable:$true] %s14
      %17 = dma.hbm_to_vmem [thread:$0]  %s0, 256, %s15, [#allocation3]
    $region5: #{tpu_custom_call.1} parent=1 // pred_fallthru
      _
    // Predicated region
    $region6: #{tpu_custom_call.1} parent=1 // pred_check
      _
    $region7: #{tpu_custom_call.1} parent=1 // pred_check_branch
      %19 = sbr.rel (0) target = $region9
    $region8: #{tpu_custom_call.1} parent=1 // pred_region
      %20 = dma.done [#allocation3], 256
    $region9: #{tpu_custom_call.1} parent=1 // pred_fallthru
      _
    %v21 = vld [vmem:[#allocation2] sm:$0xff]
    %v22 = vld [vmem:[#allocation2 + $0x8] sm:$0xff]
    %23 = vst [vmem:[#allocation5] sm:$0xff] %v21
    %24 = vst [vmem:[#allocation5 + $0x8] sm:$0xff] %v22
    // Predicated region
    $region10: #{tpu_custom_call.1} parent=1 // pred_check
      _
    $region11: #{tpu_custom_call.1} parent=1 // pred_check_branch
      %26 = sbr.rel (0) target = $region13
    $region12: #{tpu_custom_call.1} parent=1 // pred_region
      %s28 = ssub.s32 256, 256
      %29 = vsyncadd [#allocation4], %s28
      %s31 = sshll.u32 [#allocation5], 4
      %s32 = int_to_ptr.vmem [resolvable:$true] %s31
      %34 = dma.vmem_to_hbm [thread:$0]  %s32, 256, %s1, [#allocation4]
    $region13: #{tpu_custom_call.1} parent=1 // pred_fallthru
      _
    // Predicated region
    $region14: #{tpu_custom_call.1} parent=1 // pred_check
      _
    $region15: #{tpu_custom_call.1} parent=1 // pred_check_branch
      %36 = sbr.rel (0) target = $region17
    $region16: #{tpu_custom_call.1} parent=1 // pred_region
      %37 = dma.done [#allocation4], 256
    $region17: #{tpu_custom_call.1} parent=1 // pred_fallthru
      _
    %38 = vsyncpa [#allocation3], 1
    %39 = vsyncpa [#allocation4], 1

</llo_original>
